<compile_context>
chip_gen: v7x
topology: tpu7x:2x2x1
jax: 0.10.0
libtpu: 0.0.40
codegen_flags: <defaults>
</compile_context>

<pallas_src>
import functools

import jax
import jax.numpy as jnp
from jax.experimental import pallas as pl
from jax.experimental.pallas import tpu as pltpu


def _global_predictor_kernel(x_ref, w1_ref, shift_ref, wfc_ref, bfc_ref,
                             out_ref, acc_ref, *, inv_p):
    # x_ref:     (Cin, TP)     one batch element's spatial tile, channels-first
    # w1_ref:    (64, Cin)     1x1 conv weight with BN scale folded in
    # shift_ref: (64, 1)       folded BN shift  = beta - mean * scale
    # wfc_ref:   (64, n_pad)   head fc weight, lane-padded to a multiple of 128
    # bfc_ref:   (1, n_pad)    head fc bias, lane-padded
    # out_ref:   (1, n_pad)    `para` for this batch element (padded)
    # acc_ref:   (64, 1)       running pooled sum over spatial tiles (f32)
    p = pl.program_id(1)

    @pl.when(p == 0)
    def _init():
        acc_ref[...] = jnp.zeros_like(acc_ref)

    # 1x1 conv as MXU matmul with the spatial axis in the lane dimension.
    x = x_ref[...].astype(jnp.float32)                    # (Cin, TP)
    h = jnp.dot(w1_ref[...].astype(jnp.float32), x,
                preferred_element_type=jnp.float32)       # (64, TP)
    # Folded BatchNorm shift + ReLU on the VPU (scale already in w1).
    h = jnp.maximum(h + shift_ref[...], 0.0)
    # Accumulate the spatial SUM (divide by P only once, in finalize).
    acc_ref[...] += jnp.sum(h, axis=1, keepdims=True)     # (64, 1)

    @pl.when(p == pl.num_programs(1) - 1)
    def _finalize():
        pooled = acc_ref[...] * inv_p                     # (64, 1) global avg pool
        # SmplResNet head fc 64 -> n_pad as broadcast-mul + sublane reduce
        # (tiny: runs once per image).
        para = jnp.sum(wfc_ref[...] * pooled, axis=0, keepdims=True) + bfc_ref[...]
        out_ref[...] = para.astype(out_ref.dtype)


def _pick_tile(p_total, max_tile=4096):
    """Largest multiple of 128 that divides P and is <= max_tile, else full P.

    max_tile=4096 keeps the (64, P_tile) f32 intermediate ~1 MiB, comfortably
    inside the scoped VMEM limits on v5e (16 MiB), v6e (32 MiB) and v7x (32 MiB
    scoped / 64 MiB physical) while being wide enough (>=512 lanes) to sit near
    the HBM roofline.
    """
    best = None
    t = 128
    while t <= min(p_total, max_tile):
        if p_total % t == 0:
            best = t
        t += 128
    return best if best is not None else p_total


def global_predictor_forward(x_nchw, params, *, tile_p=None):
    """x_nchw: (B, Cin, H, W) float32/bfloat16 (NCHW, like the PyTorch module).

    Returns a dict mimicking the PyTorch module's return_dict.
    """
    B, C, H, W = x_nchw.shape
    P = H * W
    # Pure reshape (no HBM transpose pass): keep P in the lane dimension.
    x = x_nchw.reshape(B, C, P)

    # ---- Host/XLA-side parameter folding (done once, tiny) -------------------
    eps = params['bn_eps']
    scale = params['bn_gamma'] / jnp.sqrt(params['bn_var'] + eps)          # (64,)
    shift = (params['bn_beta'] - params['bn_mean'] * scale).reshape(-1, 1)  # (64,1)
    w1f = (params['conv_w'] * scale[:, None]).astype(jnp.float32)           # (64,C)
    mid = w1f.shape[0]

    n_cls = params['fc_w'].shape[0]
    n_pad = ((n_cls + 127) // 128) * 128     # 229 -> 256: unmasked lane-dense stores
    wfc = jnp.zeros((mid, n_pad), jnp.float32).at[:, :n_cls].set(params['fc_w'].T)
    bfc = jnp.zeros((1, n_pad), jnp.float32).at[:, :n_cls].set(params['fc_b'][None, :])

    # ---- Tiling over the spatial axis ---------------------------------------
    if tile_p is None:
        tile_p = _pick_tile(P)
    assert P % tile_p == 0, "tile_p must divide H*W (keeps the mean exact)"
    assert tile_p % 128 == 0 or tile_p == P, "tile_p must be lane-aligned or full"
    n_p_tiles = P // tile_p

    kernel = functools.partial(_global_predictor_kernel, inv_p=1.0 / P)

    itemsize = jnp.dtype(x.dtype).itemsize
    cost = pl.CostEstimate(
        flops=int(2 * B * P * C * mid + 2 * B * mid * n_pad),
        transcendentals=0,
        bytes_accessed=int(B * C * P * itemsize
                           + (mid * C + mid + mid * n_pad + n_pad) * 4
                           + B * n_pad * 4),
    )

    out = pl.pallas_call(
        kernel,
        out_shape=jax.ShapeDtypeStruct((B, 1, n_pad), jnp.float32),
        grid=(B, n_p_tiles),
        in_specs=[
            pl.BlockSpec((None, C, tile_p), lambda b, p: (b, 0, p)),  # x tiles
            pl.BlockSpec((mid, C), lambda b, p: (0, 0)),              # folded conv w
            pl.BlockSpec((mid, 1), lambda b, p: (0, 0)),              # BN shift
            pl.BlockSpec((mid, n_pad), lambda b, p: (0, 0)),          # head fc w
            pl.BlockSpec((1, n_pad), lambda b, p: (0, 0)),            # head fc b
        ],
        out_specs=pl.BlockSpec((None, 1, n_pad), lambda b, p: (b, 0, 0)),
        scratch_shapes=[pltpu.VMEM((mid, 1), jnp.float32)],           # pooled sum
        compiler_params=pltpu.CompilerParams(
            dimension_semantics=("parallel", "arbitrary")),
        cost_estimate=cost,
    )(x, w1f, shift, wfc, bfc)

    para = out[:, 0, :n_cls]
    return {'visualization': {}, 'losses': {}, 'para': para}


def make_params(key, in_channels=3, mid_channels=64, num_classes=229):
    """Deterministic synthetic parameters in PyTorch-like layout."""
    k1, k2, k3, k4, k5, k6, k7 = jax.random.split(key, 7)
    # Conv2d(in, 64, 1, bias=False) weight (64, in, 1, 1) squeezed -> (64, in)
    conv_w = jax.random.normal(k1, (mid_channels, in_channels), jnp.float32) * 0.1
    # BatchNorm2d(64) inference statistics
    bn_gamma = 1.0 + 0.01 * jax.random.normal(k2, (mid_channels,), jnp.float32)
    bn_beta = 0.01 * jax.random.normal(k3, (mid_channels,), jnp.float32)
    bn_mean = 0.01 * jax.random.normal(k6, (mid_channels,), jnp.float32)
    bn_var = 1.0 + 0.1 * jax.random.uniform(k7, (mid_channels,), jnp.float32)
    # SmplResNet head fc: Linear(64, 229) weight (229, 64), bias (229,)
    fc_w = jax.random.normal(k4, (num_classes, mid_channels), jnp.float32) * 0.05
    fc_b = 0.01 * jax.random.normal(k5, (num_classes,), jnp.float32)
    return dict(conv_w=conv_w, bn_gamma=bn_gamma, bn_beta=bn_beta,
                bn_mean=bn_mean, bn_var=bn_var, bn_eps=1e-5,
                fc_w=fc_w, fc_b=fc_b)


def _reference(x_nchw, params):
    """Pure-JAX reference (conv1x1 + BN + ReLU + GAP + fc)."""
    B, C, H, W = x_nchw.shape
    x = jnp.transpose(x_nchw, (0, 2, 3, 1)).reshape(B, H * W, C)
    h = jnp.einsum('bpc,dc->bpd', x, params['conv_w'],
                   precision=jax.lax.Precision.HIGHEST)
    scale = params['bn_gamma'] / jnp.sqrt(params['bn_var'] + params['bn_eps'])
    shift = params['bn_beta'] - params['bn_mean'] * scale
    h = jnp.maximum(h * scale + shift, 0.0)
    pooled = jnp.mean(h, axis=1)
    return (jnp.dot(pooled, params['fc_w'].T,
                    precision=jax.lax.Precision.HIGHEST) + params['fc_b'])


if __name__ == "__main__":
    key = jax.random.PRNGKey(0)
    kx, kp = jax.random.split(key)

    B, C, H, W = 2, 3, 16, 16            # INPUT_MODE='rgb' -> 3 input channels
    x = jax.random.normal(kx, (B, C, H, W), jnp.float32)
    params = make_params(kp, in_channels=C)

    # tile_p=128 -> 2 spatial tiles per image: exercises init / accumulate /
    # finalize of the streamed reduction even at this toy size.
    out = global_predictor_forward(x, params, tile_p=128)
    para = jax.block_until_ready(out['para'])

    ref = _reference(x, params)
    assert para.shape == (B, 229), para.shape
    assert jnp.allclose(para, ref, atol=1e-3, rtol=1e-3), "mismatch vs reference"
    print("KERNEL_OK")
</pallas_src>

<mosaic_0001>
module attributes {stable_mosaic.version = 11 : i64} {
  func.func @_global_predictor_kernel(%arg0: i32, %arg1: i32, %arg2: memref<1x3x128xf32, #tpu.memory_space<vmem>>, %arg3: memref<64x3xf32, #tpu.memory_space<vmem>>, %arg4: memref<64x1xf32, #tpu.memory_space<vmem>>, %arg5: memref<64x256xf32, #tpu.memory_space<vmem>>, %arg6: memref<1x256xf32, #tpu.memory_space<vmem>>, %arg7: memref<1x1x256xf32, #tpu.memory_space<vmem>>, %arg8: memref<64x1xf32, #tpu.memory_space<vmem>>) attributes {dimension_semantics = [#tpu.dimension_semantics<parallel>, #tpu.dimension_semantics<arbitrary>], iteration_bounds = array<i64: 2, 2>, scalar_prefetch = 0 : i64, scratch_operands = 1 : i64, tpu.core_type = #tpu.core_type<tc>, window_params = [{transform_indices = @transform_0, window_bounds = array<i64: 1, 3, 128>}, {pipeline_mode = #tpu.pipeline_mode<synchronous>, transform_indices = @transform_1, window_bounds = array<i64: 64, 3>}, {pipeline_mode = #tpu.pipeline_mode<synchronous>, transform_indices = @transform_2, window_bounds = array<i64: 64, 1>}, {pipeline_mode = #tpu.pipeline_mode<synchronous>, transform_indices = @transform_3, window_bounds = array<i64: 64, 256>}, {pipeline_mode = #tpu.pipeline_mode<synchronous>, transform_indices = @transform_4, window_bounds = array<i64: 1, 256>}, {transform_indices = @transform_5, window_bounds = array<i64: 1, 1, 256>}]} {
    %c0_i32 = arith.constant 0 : i32
    %0 = arith.cmpi eq, %arg1, %c0_i32 : i32
    %1 = arith.extui %0 : i1 to i32
    %c0_i32_0 = arith.constant 0 : i32
    %2 = arith.cmpi ne, %1, %c0_i32_0 : i32
    scf.if %2 {
      %cst_14 = arith.constant 0.000000e+00 : f32
      %20 = vector.broadcast %cst_14 : f32 to vector<64x1xf32>
      %c0_15 = arith.constant 0 : index
      %c0_16 = arith.constant 0 : index
      %21 = vector.load %arg8[%c0_15, %c0_16] : memref<64x1xf32, #tpu.memory_space<vmem>>, vector<64x1xf32>
      tpu.vector_store %arg8[%c0_15, %c0_16], %20 {strides = array<i32>} : memref<64x1xf32, #tpu.memory_space<vmem>>, vector<64x1xf32>,
    } else {
    }
    %c0 = arith.constant 0 : index
    %c0_1 = arith.constant 0 : index
    %c0_2 = arith.constant 0 : index
    %3 = vector.load %arg2[%c0, %c0_1, %c0_2] : memref<1x3x128xf32, #tpu.memory_space<vmem>>, vector<1x3x128xf32>
    %4 = vector.shape_cast %3 : vector<1x3x128xf32> to vector<3x128xf32>
    %c0_3 = arith.constant 0 : index
    %c0_4 = arith.constant 0 : index
    %5 = vector.load %arg3[%c0_3, %c0_4] : memref<64x3xf32, #tpu.memory_space<vmem>>, vector<64x3xf32>
    %cst = arith.constant dense<0.000000e+00> : vector<64x128xf32>
    %6 = tpu.matmul %5, %4, %cst {dimension_numbers = #tpu.dot_dimension_numbers<[1], [0], [0], [1], [0, 0, 1, 1], [], []>} : vector<64x3xf32>, vector<3x128xf32>, vector<64x128xf32> -> vector<64x128xf32>
    %c0_5 = arith.constant 0 : index
    %c0_6 = arith.constant 0 : index
    %7 = vector.load %arg4[%c0_5, %c0_6] : memref<64x1xf32, #tpu.memory_space<vmem>>, vector<64x1xf32>
    %8 = vector.broadcast %7 : vector<64x1xf32> to vector<64x128xf32>
    %9 = arith.addf %6, %8 : vector<64x128xf32>
    %cst_7 = arith.constant 0.000000e+00 : f32
    %10 = vector.broadcast %cst_7 : f32 to vector<64x128xf32>
    %11 = arith.maximumf %9, %10 : vector<64x128xf32>
    %c0_8 = arith.constant 0 : index
    %c0_9 = arith.constant 0 : index
    %12 = vector.load %arg8[%c0_8, %c0_9] : memref<64x1xf32, #tpu.memory_space<vmem>>, vector<64x1xf32>
    %cst_10 = arith.constant dense<0.000000e+00> : vector<64xf32>
    %13 = vector.multi_reduction <add>, %11, %cst_10 [1] : vector<64x128xf32> to vector<64xf32>
    %14 = vector.shape_cast %13 : vector<64xf32> to vector<64x1xf32>
    %15 = arith.addf %12, %14 : vector<64x1xf32>
    %c0_11 = arith.constant 0 : index
    %c0_12 = arith.constant 0 : index
    %16 = vector.load %arg8[%c0_11, %c0_12] : memref<64x1xf32, #tpu.memory_space<vmem>>, vector<64x1xf32>
    tpu.vector_store %arg8[%c0_11, %c0_12], %15 {strides = array<i32>} : memref<64x1xf32, #tpu.memory_space<vmem>>, vector<64x1xf32>,
    %c1_i32 = arith.constant 1 : i32
    %17 = arith.cmpi eq, %arg1, %c1_i32 : i32
    %18 = arith.extui %17 : i1 to i32
    %c0_i32_13 = arith.constant 0 : i32
    %19 = arith.cmpi ne, %18, %c0_i32_13 : i32
    scf.if %19 {
      %c0_14 = arith.constant 0 : index
      %c0_15 = arith.constant 0 : index
      %20 = vector.load %arg8[%c0_14, %c0_15] : memref<64x1xf32, #tpu.memory_space<vmem>>, vector<64x1xf32>
      %cst_16 = arith.constant 3.906250e-03 : f32
      %21 = vector.broadcast %cst_16 : f32 to vector<64x1xf32>
      %22 = arith.mulf %20, %21 : vector<64x1xf32>
      %c0_17 = arith.constant 0 : index
      %c0_18 = arith.constant 0 : index
      %23 = vector.load %arg5[%c0_17, %c0_18] : memref<64x256xf32, #tpu.memory_space<vmem>>, vector<64x256xf32>
      %24 = vector.broadcast %22 : vector<64x1xf32> to vector<64x256xf32>
      %25 = arith.mulf %23, %24 : vector<64x256xf32>
      %cst_19 = arith.constant dense<0.000000e+00> : vector<256xf32>
      %26 = vector.multi_reduction <add>, %25, %cst_19 [0] : vector<64x256xf32> to vector<256xf32>
      %27 = vector.shape_cast %26 : vector<256xf32> to vector<1x256xf32>
      %c0_20 = arith.constant 0 : index
      %c0_21 = arith.constant 0 : index
      %28 = vector.load %arg6[%c0_20, %c0_21] : memref<1x256xf32, #tpu.memory_space<vmem>>, vector<1x256xf32>
      %29 = arith.addf %27, %28 : vector<1x256xf32>
      %c0_22 = arith.constant 0 : index
      %c0_23 = arith.constant 0 : index
      %c0_24 = arith.constant 0 : index
      %30 = vector.load %arg7[%c0_22, %c0_23, %c0_24] : memref<1x1x256xf32, #tpu.memory_space<vmem>>, vector<1x1x256xf32>
      %31 = vector.shape_cast %30 : vector<1x1x256xf32> to vector<1x256xf32>
      %32 = vector.shape_cast %29 : vector<1x256xf32> to vector<1x1x256xf32>
      tpu.vector_store %arg7[%c0_22, %c0_23, %c0_24], %32 {strides = array<i32>} : memref<1x1x256xf32, #tpu.memory_space<vmem>>, vector<1x1x256xf32>,
    } else {
    }
    return
  }
  func.func @transform_0(%arg0: i32, %arg1: i32) -> (i32, i32, i32) {
    %c0_i32 = arith.constant 0 : i32
    %c0_i32_0 = arith.constant 0 : i32
    return %arg0, %c0_i32, %arg1 : i32, i32, i32
  }
  func.func @transform_1(%arg0: i32, %arg1: i32) -> (i32, i32) {
    %c0_i32 = arith.constant 0 : i32
    %c0_i32_0 = arith.constant 0 : i32
    %c0_i32_1 = arith.constant 0 : i32
    return %c0_i32, %c0_i32_0 : i32, i32
  }
  func.func @transform_2(%arg0: i32, %arg1: i32) -> (i32, i32) {
    %c0_i32 = arith.constant 0 : i32
    %c0_i32_0 = arith.constant 0 : i32
    %c0_i32_1 = arith.constant 0 : i32
    return %c0_i32, %c0_i32_0 : i32, i32
  }
  func.func @transform_3(%arg0: i32, %arg1: i32) -> (i32, i32) {
    %c0_i32 = arith.constant 0 : i32
    %c0_i32_0 = arith.constant 0 : i32
    %c0_i32_1 = arith.constant 0 : i32
    return %c0_i32, %c0_i32_0 : i32, i32
  }
  func.func @transform_4(%arg0: i32, %arg1: i32) -> (i32, i32) {
    %c0_i32 = arith.constant 0 : i32
    %c0_i32_0 = arith.constant 0 : i32
    %c0_i32_1 = arith.constant 0 : i32
    return %c0_i32, %c0_i32_0 : i32, i32
  }
  func.func @transform_5(%arg0: i32, %arg1: i32) -> (i32, i32, i32) {
    %c0_i32 = arith.constant 0 : i32
    %c0_i32_0 = arith.constant 0 : i32
    %c0_i32_1 = arith.constant 0 : i32
    return %arg0, %c0_i32, %c0_i32_0 : i32, i32, i32
  }
}

</mosaic_0001>

<llo_original>
// kernel: tpu_custom_call.1
$region0: #{tpu_custom_call.1}
  #allocation0 [shape = 'u32[]', space=smem, size = 0x4, offset = 0x4, fixed_abs, tag = 'smem constant byte address 0x4 - core index']
  #allocation1 [shape = 'u32[144,128]{1,0:T(1,128)}', space=vmem, size = 0x12000, scoped, tag = 'internal scratch']
  #allocation2 [shape = 'f32[64,1]{1,0:T(8,128)}', space=vmem, size = 0x8000, scoped, tag = 'scratch operand']
  %s0 = inlined_call_operand.vmem [shape: f32[2,3,256], index: 0, kind: input, shape index: {}]
  %s1 = inlined_call_operand.vmem [shape: f32[64,3], index: 1, kind: input, shape index: {}]
  %s2 = inlined_call_operand.vmem [shape: f32[64,1], index: 2, kind: input, shape index: {}]
  %s3 = inlined_call_operand.vmem [shape: f32[64,256], index: 3, kind: input, shape index: {}]
  %s4 = inlined_call_operand.vmem [shape: f32[1,256], index: 4, kind: input, shape index: {}]
  %s5 = inlined_call_operand.hbm [shape: f32[2,1,256], index: 5, kind: output, shape index: {}]
  %s6 = sld [smem:[#allocation0]]
  $region61: #{tpu_custom_call.1} parent=0
    _
  %s8 = ssub.s32 1, %s6
  %s9 = scalar_select 0, %s8, %s6
  $region1: #{tpu_custom_call.1} parent=0
    #allocation3 [shape = 'u8[2048]{0}', space=vmem, size = 0x800, scoped, tag = 'output window, operand 0']
    #allocation4 [shape = 's32[2]{0}', space=sflag, size = 0x8, scoped, tag = 'scoped memory for tpu_custom_call.1']
    %10 = vsyncpa [#allocation4], 0
    %s11 = scalar_lea.sflag [#allocation4], 1
    %12 = vsyncpa %s11, 0
    loop: start=0, step=1, limit=6
    $region2: #{tpu_custom_call.1} parent=1 // loop_pre_header
      _
    $region3: #{tpu_custom_call.1} parent=1 // loop_header
      %s14 = sphi 0, %s18
      %p15 = scmp.ge.s32.totalorder %s14, 6
      %s21 = sphi 0, %s33
      %s22 = sphi 0, %s29
      %s23 = sphi 0, %s21
      %s24 = sphi 0, %s22
      %s25 = sphi 0, %s23
      %s26 = sphi 0, %s24
      %s38 = sphi 0, %s40
      %s41 = sphi 0, %s38
      %s42 = sphi 0, %s41
      %s58 = sphi 0, %s42
      %s62 = sphi 0, %s62
      %s64 = sphi 0, %s62
      %s65 = sphi 0, %s64
      %s79 = sphi 0, %s65
      %s83 = sphi 0, %s83
      %s85 = sphi 0, %s83
      %s86 = sphi 0, %s85
      %s100 = sphi 0, %s86
      %s104 = sphi 0, %s104
      %s106 = sphi 0, %s104
      %s107 = sphi 0, %s106
      %s121 = sphi 0, %s107
      %s125 = sphi 0, %s125
      %s127 = sphi 0, %s125
      %s128 = sphi 0, %s127
      %s142 = sphi 0, %s128
      %s148 = sphi 0, %s150
      %s151 = sphi 0, %s148
      %s152 = sphi 0, %s151
      %s168 = sphi 0, %s152
    $region4: #{tpu_custom_call.1} parent=1 // loop_header_branch
      %17 = sbr.rel (%p15) target = $region8
    $region5: #{tpu_custom_call.1} parent=1 // loop_body
      %s19 = ssub.s32 %s14, 1
      %s20 = ssub.s32 %s14, 2
      %s27 = sadd.s32 1, %s22
      %p28 = scmp.ge.s32.totalorder %s27, 2
      %s29 = scalar_select %p28, 0, %s27
      %s30 = sadd.s32 1, %s21
      %s31 = scalar_select %p28, %s30, %s21
      %p32 = scmp.ge.s32.totalorder %s31, 2
      %s33 = scalar_select %p32, 0, %s31
      %s34 = ssub.s32 %s21, %s33
      %s35 = ssub.s32 %s22, %s29
      %s36 = sor.u32 %s34, %s35
      %p37 = scmp.eq.s32.totalorder %s36, 0
      %s39 = sadd.s32 %s38, 1
      %s40 = scalar_select %p37, %s38, %s39
      %p43 = pneg %p37
      %p44 = scmp.eq.s32.totalorder %s14, 3
      %p45 = por %p43, %p44
      %p46 = scmp.ne.s32.totalorder %s38, %s41
      %p47 = scmp.eq.s32.totalorder %s14, 0
      %p48 = por %p46, %p47
      %p49 = scmp.ne.s32.totalorder %s38, %s41
      %p50 = scmp.eq.s32.totalorder %s19, 3
      %p51 = por %p49, %p50
      %p52 = scmp.ne.s32.totalorder %s41, %s42
      %p53 = scmp.eq.s32.totalorder %s19, 0
      %p54 = por %p52, %p53
      %p55 = scmp.ne.s32.totalorder %s41, %s42
      %p56 = scmp.eq.s32.totalorder %s20, 3
      %p57 = por %p55, %p56
      %p59 = scmp.ne.s32.totalorder %s42, %s58
      %p60 = scmp.eq.s32.totalorder %s20, 0
      %p61 = por %p59, %p60
      %s63 = sadd.s32 %s62, 1
      %p66 = scmp.eq.s32.totalorder %s14, 3
      %p67 = scmp.ne.s32.totalorder %s62, %s64
      %p68 = scmp.eq.s32.totalorder %s14, 0
      %p69 = por %p67, %p68
      %p70 = scmp.ne.s32.totalorder %s62, %s64
      %p71 = scmp.eq.s32.totalorder %s19, 3
      %p72 = por %p70, %p71
      %p73 = scmp.ne.s32.totalorder %s64, %s65
      %p74 = scmp.eq.s32.totalorder %s19, 0
      %p75 = por %p73, %p74
      %p76 = scmp.ne.s32.totalorder %s64, %s65
      %p77 = scmp.eq.s32.totalorder %s20, 3
      %p78 = por %p76, %p77
      %p80 = scmp.ne.s32.totalorder %s65, %s79
      %p81 = scmp.eq.s32.totalorder %s20, 0
      %p82 = por %p80, %p81
      %s84 = sadd.s32 %s83, 1
      %p87 = scmp.eq.s32.totalorder %s14, 3
      %p88 = scmp.ne.s32.totalorder %s83, %s85
      %p89 = scmp.eq.s32.totalorder %s14, 0
      %p90 = por %p88, %p89
      %p91 = scmp.ne.s32.totalorder %s83, %s85
      %p92 = scmp.eq.s32.totalorder %s19, 3
      %p93 = por %p91, %p92
      %p94 = scmp.ne.s32.totalorder %s85, %s86
      %p95 = scmp.eq.s32.totalorder %s19, 0
      %p96 = por %p94, %p95
      %p97 = scmp.ne.s32.totalorder %s85, %s86
      %p98 = scmp.eq.s32.totalorder %s20, 3
      %p99 = por %p97, %p98
      %p101 = scmp.ne.s32.totalorder %s86, %s100
      %p102 = scmp.eq.s32.totalorder %s20, 0
      %p103 = por %p101, %p102
      %s105 = sadd.s32 %s104, 1
      %p108 = scmp.eq.s32.totalorder %s14, 3
      %p109 = scmp.ne.s32.totalorder %s104, %s106
      %p110 = scmp.eq.s32.totalorder %s14, 0
      %p111 = por %p109, %p110
      %p112 = scmp.ne.s32.totalorder %s104, %s106
      %p113 = scmp.eq.s32.totalorder %s19, 3
      %p114 = por %p112, %p113
      %p115 = scmp.ne.s32.totalorder %s106, %s107
      %p116 = scmp.eq.s32.totalorder %s19, 0
      %p117 = por %p115, %p116
      %p118 = scmp.ne.s32.totalorder %s106, %s107
      %p119 = scmp.eq.s32.totalorder %s20, 3
      %p120 = por %p118, %p119
      %p122 = scmp.ne.s32.totalorder %s107, %s121
      %p123 = scmp.eq.s32.totalorder %s20, 0
      %p124 = por %p122, %p123
      %s126 = sadd.s32 %s125, 1
      %p129 = scmp.eq.s32.totalorder %s14, 3
      %p130 = scmp.ne.s32.totalorder %s125, %s127
      %p131 = scmp.eq.s32.totalorder %s14, 0
      %p132 = por %p130, %p131
      %p133 = scmp.ne.s32.totalorder %s125, %s127
      %p134 = scmp.eq.s32.totalorder %s19, 3
      %p135 = por %p133, %p134
      %p136 = scmp.ne.s32.totalorder %s127, %s128
      %p137 = scmp.eq.s32.totalorder %s19, 0
      %p138 = por %p136, %p137
      %p139 = scmp.ne.s32.totalorder %s127, %s128
      %p140 = scmp.eq.s32.totalorder %s20, 3
      %p141 = por %p139, %p140
      %p143 = scmp.ne.s32.totalorder %s128, %s142
      %p144 = scmp.eq.s32.totalorder %s20, 0
      %p145 = por %p143, %p144
      %s146 = ssub.s32 %s21, %s33
      %p147 = scmp.eq.s32.totalorder %s146, 0
      %s149 = sadd.s32 %s148, 1
      %s150 = scalar_select %p147, %s148, %s149
      %p153 = pneg %p147
      %p154 = scmp.eq.s32.totalorder %s14, 3
      %p155 = por %p153, %p154
      %p156 = scmp.ne.s32.totalorder %s148, %s151
      %p157 = scmp.eq.s32.totalorder %s14, 0
      %p158 = por %p156, %p157
      %p159 = scmp.ne.s32.totalorder %s148, %s151
      %p160 = scmp.eq.s32.totalorder %s19, 3
      %p161 = por %p159, %p160
      %p162 = scmp.ne.s32.totalorder %s151, %s152
      %p163 = scmp.eq.s32.totalorder %s19, 0
      %p164 = por %p162, %p163
      %p165 = scmp.ne.s32.totalorder %s151, %s152
      %p166 = scmp.eq.s32.totalorder %s20, 3
      %p167 = por %p165, %p166
      %p169 = scmp.ne.s32.totalorder %s152, %s168
      %p170 = scmp.eq.s32.totalorder %s20, 0
      %p171 = por %p169, %p170
      %p172 = scmp.le.s32.totalorder 1, %s14
      %p173 = scmp.lt.s32.totalorder %s14, 5
      %p174 = pnand %p172, %p173
      %p175 = pneg %p174
      // Predicated region
      $region9: #{tpu_custom_call.1} parent=5 // pred_check
        _
      $region10: #{tpu_custom_call.1} parent=5 // pred_check_branch
        %177 = sbr.rel (%p174) target = $region12
      $region11: #{tpu_custom_call.1} parent=5 // pred_region
        %s178 = ssub.s32 %s14, 1
        // Predicated region
        $region13: #{tpu_custom_call.1} parent=11 // pred_check
          %p179 = pneg %p75
        $region14: #{tpu_custom_call.1} parent=11 // pred_check_branch
          %181 = sbr.rel (%p179) target = $region16
        $region15: #{tpu_custom_call.1} parent=11 // pred_region
          _
        $region16: #{tpu_custom_call.1} parent=11 // pred_fallthru
          _
        // Predicated region
        $region17: #{tpu_custom_call.1} parent=11 // pred_check
          %p182 = pneg %p96
        $region18: #{tpu_custom_call.1} parent=11 // pred_check_branch
          %184 = sbr.rel (%p182) target = $region20
        $region19: #{tpu_custom_call.1} parent=11 // pred_region
          _
        $region20: #{tpu_custom_call.1} parent=11 // pred_fallthru
          _
        // Predicated region
        $region21: #{tpu_custom_call.1} parent=11 // pred_check
          %p185 = pneg %p117
        $region22: #{tpu_custom_call.1} parent=11 // pred_check_branch
          %187 = sbr.rel (%p185) target = $region24
        $region23: #{tpu_custom_call.1} parent=11 // pred_region
          _
        $region24: #{tpu_custom_call.1} parent=11 // pred_fallthru
          _
        // Predicated region
        $region25: #{tpu_custom_call.1} parent=11 // pred_check
          %p188 = pneg %p138
        $region26: #{tpu_custom_call.1} parent=11 // pred_check_branch
          %190 = sbr.rel (%p188) target = $region28
        $region27: #{tpu_custom_call.1} parent=11 // pred_region
          _
        $region28: #{tpu_custom_call.1} parent=11 // pred_fallthru
          _
      $region12: #{tpu_custom_call.1} parent=5 // pred_fallthru
        _
      %p191 = scmp.lt.s32.totalorder %s14, 4
      // Predicated region
      $region29: #{tpu_custom_call.1} parent=5 // pred_check
        %p192 = pneg %p191
      $region30: #{tpu_custom_call.1} parent=5 // pred_check_branch
        %194 = sbr.rel (%p192) target = $region32
      $region31: #{tpu_custom_call.1} parent=5 // pred_region
        // Predicated region
        $region33: #{tpu_custom_call.1} parent=31 // pred_check
          %p195 = pneg %p48
        $region34: #{tpu_custom_call.1} parent=31 // pred_check_branch
          %197 = sbr.rel (%p195) target = $region36
        $region35: #{tpu_custom_call.1} parent=31 // pred_region
          %p198 = scmp.lt.s32.totalorder %s21, 1
          %s199 = scalar_select %p198, %s21, 1
          %p200 = scmp.lt.s32.totalorder %s22, 1
          %s201 = scalar_select %p200, %s22, 1
          %s202 = smul.addr %s199, 2
          %s203 = sadd.s32 %s201, %s202
          %s204 = smul.addr %s203, 4
          %s205 = scalar_lea.vmem %s0, %s204
        $region36: #{tpu_custom_call.1} parent=31 // pred_fallthru
          _
      $region32: #{tpu_custom_call.1} parent=5 // pred_fallthru
        _
      %p206 = scmp.le.s32.totalorder 1, %s14
      %p207 = scmp.lt.s32.totalorder %s14, 5
      %p208 = pnand %p206, %p207
      %p209 = pneg %p208
      // Predicated region
      $region37: #{tpu_custom_call.1} parent=5 // pred_check
        _
      $region38: #{tpu_custom_call.1} parent=5 // pred_check_branch
        %211 = sbr.rel (%p208) target = $region40
      $region39: #{tpu_custom_call.1} parent=5 // pred_region
        %s212 = ssub.s32 %s14, 1
        %p213 = scmp.lt.s32.totalorder %s23, 1
        %s214 = scalar_select %p213, %s23, 1
        %p215 = scmp.lt.s32.totalorder %s24, 1
        %s216 = scalar_select %p215, %s24, 1
        %s217 = smul.addr %s214, 2
        %s218 = sadd.s32 %s216, %s217
        %s219 = smul.addr %s218, 4
        %s220 = scalar_lea.vmem %s0, %s219
        %p221 = pneg %p54
        %p222 = pneg %p51
        %p223 = pneg %p75
        %p224 = pneg %p72
        %p225 = pneg %p96
        %p226 = pneg %p93
        %p227 = pneg %p117
        %p228 = pneg %p114
        %p229 = pneg %p138
        %p230 = pneg %p135
        %p231 = pneg %p164
        %p232 = pneg %p161
        %s233 = sand.u32 %s151, 1
        %s234 = scalar_lea.sflag [#allocation4], %s233
        %s235 = sand.u32 %s151, 1
        %s236 = smul.addr %s235, 2
        %s237 = scalar_lea.vmem [#allocation3], %s236
        %p238 = scmp.lt.s32.totalorder %s23, 1
        %s239 = scalar_select %p238, %s23, 1
        %p240 = scmp.lt.s32.totalorder %s24, 1
        %s241 = scalar_select %p240, %s24, 1
        %s242 = smul.addr %s239, 2
        %s243 = sadd.s32 %s241, %s242
        %s244 = smul.addr %s243, 4
        %s245 = scalar_lea.vmem %s0, %s244
        %p246 = scmp.eq.s32.totalorder %s24, 0
        // Predicated region
        $region41: #{tpu_custom_call.1} parent=39 // pred_check
          %p247 = pneg %p246
        $region42: #{tpu_custom_call.1} parent=39 // pred_check_branch
          %249 = sbr.rel (%p247) target = $region44
        $region43: #{tpu_custom_call.1} parent=39 // pred_region
          %vm250 = vcmask 7168
          %251 = vst.msk [vmem:[#allocation2] sm:$0xff] %vm250, 0.0
          %252 = vst.msk [vmem:[#allocation2 + $0x8] sm:$0xff] %vm250, 0.0
          %253 = vst.msk [vmem:[#allocation2 + $0x10] sm:$0xff] %vm250, 0.0
          %254 = vst.msk [vmem:[#allocation2 + $0x18] sm:$0xff] %vm250, 0.0
          %255 = vst.msk [vmem:[#allocation2 + $0x20] sm:$0xff] %vm250, 0.0
          %256 = vst.msk [vmem:[#allocation2 + $0x28] sm:$0xff] %vm250, 0.0
          %257 = vst.msk [vmem:[#allocation2 + $0x30] sm:$0xff] %vm250, 0.0
          %258 = vst.msk [vmem:[#allocation2 + $0x38] sm:$0xff] %vm250, 0.0
        $region44: #{tpu_custom_call.1} parent=39 // pred_fallthru
          _
        %v259 = vld [vmem:[%s245] sm:$0x7]
        %v260 = vld [vmem:[%s1] sm:$0xff]
        %v261 = vld [vmem:[%s1 + $0x8] sm:$0xff]
        %v262 = vld [vmem:[%s1 + $0x10] sm:$0xff]
        %v263 = vld [vmem:[%s1 + $0x18] sm:$0xff]
        %v264 = vld [vmem:[%s1 + $0x20] sm:$0xff]
        %v265 = vld [vmem:[%s1 + $0x28] sm:$0xff]
        %v266 = vld [vmem:[%s1 + $0x30] sm:$0xff]
        %v267 = vld [vmem:[%s1 + $0x38] sm:$0xff]
        %v268 = vld [vmem:[%s2] sm:$0xff]
        %v269 = vld [vmem:[%s2 + $0x8] sm:$0xff]
        %v270 = vld [vmem:[%s2 + $0x10] sm:$0xff]
        %v271 = vld [vmem:[%s2 + $0x18] sm:$0xff]
        %v272 = vld [vmem:[%s2 + $0x20] sm:$0xff]
        %v273 = vld [vmem:[%s2 + $0x28] sm:$0xff]
        %v274 = vld [vmem:[%s2 + $0x30] sm:$0xff]
        %v275 = vld [vmem:[%s2 + $0x38] sm:$0xff]
        %277 = vset.pattern.permute.xlu0 0
        %278 = vperm.xlu0 %277, %v268
        %v279 = vpop.permute.xlu0 %278
        %282 = vset.pattern.permute.xlu0 0
        %283 = vperm.xlu0 %282, %v269
        %v284 = vpop.permute.xlu0 %283
        %287 = vset.pattern.permute.xlu0 0
        %288 = vperm.xlu0 %287, %v270
        %v289 = vpop.permute.xlu0 %288
        %292 = vset.pattern.permute.xlu0 0
        %293 = vperm.xlu0 %292, %v271
        %v294 = vpop.permute.xlu0 %293
        %297 = vset.pattern.permute.xlu0 0
        %298 = vperm.xlu0 %297, %v272
        %v299 = vpop.permute.xlu0 %298
        %302 = vset.pattern.permute.xlu0 0
        %303 = vperm.xlu0 %302, %v273
        %v304 = vpop.permute.xlu0 %303
        %307 = vset.pattern.permute.xlu0 0
        %308 = vperm.xlu0 %307, %v274
        %v309 = vpop.permute.xlu0 %308
        %312 = vset.pattern.permute.xlu0 0
        %313 = vperm.xlu0 %312, %v275
        %v314 = vpop.permute.xlu0 %313
        %vm316 = vcmask 23552
        %v318 = vsel %vm316, %v260, 0
        %v321 = vsel %vm316, %v261, 0
        %v324 = vsel %vm316, %v262, 0
        %v327 = vsel %vm316, %v263, 0
        %v330 = vsel %vm316, %v264, 0
        %v333 = vsel %vm316, %v265, 0
        %v336 = vsel %vm316, %v266, 0
        %v339 = vsel %vm316, %v267, 0
        %vm341 = vcmask 1042432
        %v343 = vsel %vm341, %v259, 0
        %345 = vmatprep.subr.mxu0 0.0
        %346 = vmatpush1.msra.mxu0 %v343
        %347 = vmatprep.subr.mxu0 0.0
        %348 = vmatpush1.msra.mxu0 0.0
        %349 = vmatprep.subr.mxu0 0.0
        %350 = vmatpush1.msra.mxu0 0.0
        %351 = vmatprep.subr.mxu0 0.0
        %352 = vmatpush1.msra.mxu0 0.0
        %353 = vmatprep.subr.mxu0 0.0
        %354 = vmatpush1.msra.mxu0 0.0
        %355 = vmatprep.subr.mxu0 0.0
        %356 = vmatpush1.msra.mxu0 0.0
        %357 = vmatprep.subr.mxu0 0.0
        %358 = vmatpush1.msra.mxu0 0.0
        %359 = vmatprep.subr.mxu0 0.0
        %360 = vmatpush1.msra.mxu0 0.0
        %361 = vmatprep.subr.mxu0 0.0
        %362 = vmatpush1.msra.mxu0 0.0
        %363 = vmatprep.subr.mxu0 0.0
        %364 = vmatpush1.msra.mxu0 0.0
        %365 = vmatprep.subr.mxu0 0.0
        %366 = vmatpush1.msra.mxu0 0.0
        %367 = vmatprep.subr.mxu0 0.0
        %368 = vmatpush1.msra.mxu0 0.0
        %369 = vmatprep.subr.mxu0 0.0
        %370 = vmatpush1.msra.mxu0 0.0
        %371 = vmatprep.subr.mxu0 0.0
        %372 = vmatpush1.msra.mxu0 0.0
        %373 = vmatprep.subr.mxu0 0.0
        %374 = vmatpush1.msra.mxu0 0.0
        %375 = vmatprep.subr.mxu0 0.0
        %376 = vmatpush1.msra.mxu0 0.0
        %377 = vmatprep.subr.mxu0 0.0
        %378 = vmatpush1.msra.mxu0 0.0
        %379 = vmatprep.subr.mxu0 0.0
        %380 = vmatpush1.msra.mxu0 0.0
        %381 = vmatprep.subr.mxu0 0.0
        %382 = vmatpush1.msra.mxu0 0.0
        %383 = vmatprep.subr.mxu0 0.0
        %384 = vmatpush1.msra.mxu0 0.0
        %385 = vmatprep.subr.mxu0 0.0
        %386 = vmatpush1.msra.mxu0 0.0
        %387 = vmatprep.subr.mxu0 0.0
        %388 = vmatpush1.msra.mxu0 0.0
        %389 = vmatprep.subr.mxu0 0.0
        %390 = vmatpush1.msra.mxu0 0.0
        %391 = vmatprep.subr.mxu0 0.0
        %392 = vmatpush1.msra.mxu0 0.0
        %393 = vmatprep.subr.mxu0 0.0
        %394 = vmatpush1.msra.mxu0 0.0
        %395 = vmatprep.subr.mxu0 0.0
        %396 = vmatpush1.msra.mxu0 0.0
        %397 = vmatprep.subr.mxu0 0.0
        %398 = vmatpush1.msra.mxu0 0.0
        %399 = vmatprep.subr.mxu0 0.0
        %400 = vmatpush1.msra.mxu0 0.0
        %401 = vmatprep.subr.mxu0 0.0
        %402 = vmatpush1.msra.mxu0 0.0
        %403 = vmatprep.subr.mxu0 0.0
        %404 = vmatpush1.msra.mxu0 0.0
        %405 = vmatprep.subr.mxu0 0.0
        %406 = vmatpush1.msra.mxu0 0.0
        %407 = vmatprep.subr.mxu0 0.0
        %408 = vmatpush1.msra.mxu0 0.0
        %409 = vmatprep.mubr.f32.mxu0 0.0
        %410 = vmatmul.mubr.f32.gmra.mrb[0].mxu0 %v318
        %v411 = vpop.f32.mrb[0].mxu0
        %v412 = vadd.f32 %v279, %v411
        %v413 = vpop.f32.mrb[0].mxu0
        %414 = vmatprep.mubr.f32.mxu0 0.0
        %415 = vmatmul.mubr.f32.gmra.mrb[0].mxu0 %v321
        %v416 = vpop.f32.mrb[0].mxu0
        %v417 = vadd.f32 %v284, %v416
        %v418 = vpop.f32.mrb[0].mxu0
        %419 = vmatprep.mubr.f32.mxu0 0.0
        %420 = vmatmul.mubr.f32.gmra.mrb[0].mxu0 %v324
        %v421 = vpop.f32.mrb[0].mxu0
        %v422 = vadd.f32 %v289, %v421
        %v423 = vpop.f32.mrb[0].mxu0
        %424 = vmatprep.mubr.f32.mxu0 0.0
        %425 = vmatmul.mubr.f32.gmra.mrb[0].mxu0 %v327
        %v426 = vpop.f32.mrb[0].mxu0
        %v427 = vadd.f32 %v294, %v426
        %v428 = vpop.f32.mrb[0].mxu0
        %429 = vmatprep.mubr.f32.mxu0 0.0
        %430 = vmatmul.mubr.f32.gmra.mrb[0].mxu0 %v330
        %v431 = vpop.f32.mrb[0].mxu0
        %v432 = vadd.f32 %v299, %v431
        %v433 = vpop.f32.mrb[0].mxu0
        %434 = vmatprep.mubr.f32.mxu0 0.0
        %435 = vmatmul.mubr.f32.gmra.mrb[0].mxu0 %v333
        %v436 = vpop.f32.mrb[0].mxu0
        %v437 = vadd.f32 %v304, %v436
        %v438 = vpop.f32.mrb[0].mxu0
        %439 = vmatprep.mubr.f32.mxu0 0.0
        %440 = vmatmul.mubr.f32.gmra.mrb[0].mxu0 %v336
        %v441 = vpop.f32.mrb[0].mxu0
        %v442 = vadd.f32 %v309, %v441
        %v443 = vpop.f32.mrb[0].mxu0
        %444 = vmatprep.mubr.f32.mxu0 0.0
        %445 = vmatmul.mubr.f32.gmra.mrb[0].mxu0 %v339
        %v446 = vpop.f32.mrb[0].mxu0
        %v447 = vadd.f32 %v314, %v446
        %v448 = vpop.f32.mrb[0].mxu0
        %449 = vdwg.mxu0
        %v450 = vmax.f32 %v412, 0.0
        %v451 = vmax.f32 %v417, 0.0
        %v452 = vmax.f32 %v422, 0.0
        %v453 = vmax.f32 %v427, 0.0
        %v454 = vmax.f32 %v432, 0.0
        %v455 = vmax.f32 %v437, 0.0
        %v456 = vmax.f32 %v442, 0.0
        %v457 = vmax.f32 %v447, 0.0
        %v458 = vld [vmem:[#allocation2] sm:$0xff]
        %v459 = vld [vmem:[#allocation2 + $0x8] sm:$0xff]
        %v460 = vld [vmem:[#allocation2 + $0x10] sm:$0xff]
        %v461 = vld [vmem:[#allocation2 + $0x18] sm:$0xff]
        %v462 = vld [vmem:[#allocation2 + $0x20] sm:$0xff]
        %v463 = vld [vmem:[#allocation2 + $0x28] sm:$0xff]
        %v464 = vld [vmem:[#allocation2 + $0x30] sm:$0xff]
        %v465 = vld [vmem:[#allocation2 + $0x38] sm:$0xff]
        %466 = vadd.xlane.f32.xlu0 %v450
        %v467 = vpop.xlane.xlu0 %466
        %468 = vadd.xlane.f32.xlu0 %v451
        %v469 = vpop.xlane.xlu0 %468
        %470 = vadd.xlane.f32.xlu0 %v452
        %v471 = vpop.xlane.xlu0 %470
        %472 = vadd.xlane.f32.xlu0 %v453
        %v473 = vpop.xlane.xlu0 %472
        %474 = vadd.xlane.f32.xlu0 %v454
        %v475 = vpop.xlane.xlu0 %474
        %476 = vadd.xlane.f32.xlu0 %v455
        %v477 = vpop.xlane.xlu0 %476
        %478 = vadd.xlane.f32.xlu0 %v456
        %v479 = vpop.xlane.xlu0 %478
        %480 = vadd.xlane.f32.xlu0 %v457
        %v481 = vpop.xlane.xlu0 %480
        %v482 = vadd.f32 %v458, %v467
        %v483 = vadd.f32 %v459, %v469
        %v484 = vadd.f32 %v460, %v471
        %v485 = vadd.f32 %v461, %v473
        %v486 = vadd.f32 %v462, %v475
        %v487 = vadd.f32 %v463, %v477
        %v488 = vadd.f32 %v464, %v479
        %v489 = vadd.f32 %v465, %v481
        %vm490 = vcmask 7168
        %491 = vst.msk [vmem:[#allocation2] sm:$0xff] %vm490, %v482
        %492 = vst.msk [vmem:[#allocation2 + $0x8] sm:$0xff] %vm490, %v483
        %493 = vst.msk [vmem:[#allocation2 + $0x10] sm:$0xff] %vm490, %v484
        %494 = vst.msk [vmem:[#allocation2 + $0x18] sm:$0xff] %vm490, %v485
        %495 = vst.msk [vmem:[#allocation2 + $0x20] sm:$0xff] %vm490, %v486
        %496 = vst.msk [vmem:[#allocation2 + $0x28] sm:$0xff] %vm490, %v487
        %497 = vst.msk [vmem:[#allocation2 + $0x30] sm:$0xff] %vm490, %v488
        %498 = vst.msk [vmem:[#allocation2 + $0x38] sm:$0xff] %vm490, %v489
        %p499 = scmp.eq.s32.totalorder %s24, 1
        // Predicated region
        $region45: #{tpu_custom_call.1} parent=39 // pred_check
          %p500 = pneg %p499
        $region46: #{tpu_custom_call.1} parent=39 // pred_check_branch
          %502 = sbr.rel (%p500) target = $region48
        $region47: #{tpu_custom_call.1} parent=39 // pred_region
          %v503 = vld [vmem:[#allocation2] sm:$0xff]
          %v504 = vld [vmem:[#allocation2 + $0x8] sm:$0xff]
          %v505 = vld [vmem:[#allocation2 + $0x10] sm:$0xff]
          %v506 = vld [vmem:[#allocation2 + $0x18] sm:$0xff]
          %v507 = vld [vmem:[#allocation2 + $0x20] sm:$0xff]
          %v508 = vld [vmem:[#allocation2 + $0x28] sm:$0xff]
          %v509 = vld [vmem:[#allocation2 + $0x30] sm:$0xff]
          %v510 = vld [vmem:[#allocation2 + $0x38] sm:$0xff]
          %v511 = vmul.f32 %v503, 0.00390625
          %v512 = vmul.f32 %v504, 0.00390625
          %v513 = vmul.f32 %v505, 0.00390625
          %v514 = vmul.f32 %v506, 0.00390625
          %v515 = vmul.f32 %v507, 0.00390625
          %v516 = vmul.f32 %v508, 0.00390625
          %v517 = vmul.f32 %v509, 0.00390625
          %v518 = vmul.f32 %v510, 0.00390625
          %v519 = vld [vmem:[%s3] sm:$0xff]
          %v520 = vld [vmem:[%s3 + $0x8] sm:$0xff]
          %v521 = vld [vmem:[%s3 + $0x10] sm:$0xff]
          %v522 = vld [vmem:[%s3 + $0x18] sm:$0xff]
          %v523 = vld [vmem:[%s3 + $0x20] sm:$0xff]
          %v524 = vld [vmem:[%s3 + $0x28] sm:$0xff]
          %v525 = vld [vmem:[%s3 + $0x30] sm:$0xff]
          %v526 = vld [vmem:[%s3 + $0x38] sm:$0xff]
          %v527 = vld [vmem:[%s3 + $0x40] sm:$0xff]
          %v528 = vld [vmem:[%s3 + $0x48] sm:$0xff]
          %v529 = vld [vmem:[%s3 + $0x50] sm:$0xff]
          %v530 = vld [vmem:[%s3 + $0x58] sm:$0xff]
          %v531 = vld [vmem:[%s3 + $0x60] sm:$0xff]
          %v532 = vld [vmem:[%s3 + $0x68] sm:$0xff]
          %v533 = vld [vmem:[%s3 + $0x70] sm:$0xff]
          %v534 = vld [vmem:[%s3 + $0x78] sm:$0xff]
          %536 = vset.pattern.permute.xlu0 0
          %537 = vperm.xlu0 %536, %v511
          %v538 = vpop.permute.xlu0 %537
          %541 = vset.pattern.permute.xlu0 0
          %542 = vperm.xlu0 %541, %v512
          %v543 = vpop.permute.xlu0 %542
          %546 = vset.pattern.permute.xlu0 0
          %547 = vperm.xlu0 %546, %v513
          %v548 = vpop.permute.xlu0 %547
          %551 = vset.pattern.permute.xlu0 0
          %552 = vperm.xlu0 %551, %v514
          %v553 = vpop.permute.xlu0 %552
          %556 = vset.pattern.permute.xlu0 0
          %557 = vperm.xlu0 %556, %v515
          %v558 = vpop.permute.xlu0 %557
          %561 = vset.pattern.permute.xlu0 0
          %562 = vperm.xlu0 %561, %v516
          %v563 = vpop.permute.xlu0 %562
          %566 = vset.pattern.permute.xlu0 0
          %567 = vperm.xlu0 %566, %v517
          %v568 = vpop.permute.xlu0 %567
          %571 = vset.pattern.permute.xlu0 0
          %572 = vperm.xlu0 %571, %v518
          %v573 = vpop.permute.xlu0 %572
          %v575 = vmul.f32 %v519, %v538
          %v576 = vmul.f32 %v520, %v538
          %v577 = vmul.f32 %v521, %v543
          %v578 = vmul.f32 %v522, %v543
          %v579 = vmul.f32 %v523, %v548
          %v580 = vmul.f32 %v524, %v548
          %v581 = vmul.f32 %v525, %v553
          %v582 = vmul.f32 %v526, %v553
          %v583 = vmul.f32 %v527, %v558
          %v584 = vmul.f32 %v528, %v558
          %v585 = vmul.f32 %v529, %v563
          %v586 = vmul.f32 %v530, %v563
          %v587 = vmul.f32 %v531, %v568
          %v588 = vmul.f32 %v532, %v568
          %v589 = vmul.f32 %v533, %v573
          %v590 = vmul.f32 %v534, %v573
          %v591 = vadd.f32 %v575, %v577
          %v592 = vadd.f32 %v591, %v579
          %v593 = vadd.f32 %v592, %v581
          %v594 = vadd.f32 %v593, %v583
          %v595 = vadd.f32 %v594, %v585
          %v596 = vadd.f32 %v595, %v587
          %v597 = vadd.f32 %v596, %v589
          %v598 = vrot.slane %v597, 4
          %v599 = vadd.f32 %v597, %v598
          %v600 = vrot.slane %v599, 2
          %v601 = vadd.f32 %v599, %v600
          %v602 = vrot.slane %v601, 1
          %v603 = vadd.f32 %v601, %v602
          %v604 = vadd.f32 %v576, %v578
          %v605 = vadd.f32 %v604, %v580
          %v606 = vadd.f32 %v605, %v582
          %v607 = vadd.f32 %v606, %v584
          %v608 = vadd.f32 %v607, %v586
          %v609 = vadd.f32 %v608, %v588
          %v610 = vadd.f32 %v609, %v590
          %v611 = vrot.slane %v610, 4
          %v612 = vadd.f32 %v610, %v611
          %v613 = vrot.slane %v612, 2
          %v614 = vadd.f32 %v612, %v613
          %v615 = vrot.slane %v614, 1
          %v616 = vadd.f32 %v614, %v615
          %v617 = vld [vmem:[%s4] sm:$0x3]
          %v619 = vlaneseq
          %v620 = vshrl.u32 %v619, 7
          %v621 = vsub.s32 0, %v620
          %v622 = vrot.slane %v617, %v621
          %v623 = vlaneseq
          %v624 = vshrl.u32 %v623, 7
          %v625 = vsub.s32 1, %v624
          %v626 = vrot.slane %v617, %v625
          %v629 = vadd.f32 %v603, %v622
          %v630 = vadd.f32 %v616, %v626
          %v633 = vcombine.low %v629, %v630
          %v635 = vunpack.c.l.s4 1966171168
          %v636 = vunpack.c.0.s8 %v635
          %v637 = vlaneseq
          %v638 = vshrl.u32 %v637, 7
          %v639 = vsub.s32 %v636, %v638
          %v640 = vrot.slane %v633, %v639
          %v642 = vunpack.c.l.s4 1966171168
          %v643 = vunpack.c.0.s8 %v642
          %v644 = vlaneseq
          %v645 = vshrl.u32 %v644, 7
          %v646 = vsub.s32 %v643, %v645
          %v647 = vrot.slane %v640, %v646
          %v649 = vlaneseq
          %vm650 = vcmp.ge.s32.totalorder %v649, 0
          %vm651 = vcmp.lt.s32.totalorder %v649, 256
          %vm652 = vmand %vm650, %vm651
          %653 = vst.msk [vmem:[%s237] sm:$0x3] %vm652, %v647
        $region48: #{tpu_custom_call.1} parent=39 // pred_fallthru
          _
        %s654 = sand.u32 %s151, 1
        %s655 = scalar_lea.sflag [#allocation4], %s654
        %s656 = sand.u32 %s151, 1
        %s657 = smul.addr %s656, 2
        %s658 = scalar_lea.vmem [#allocation3], %s657
        // Predicated region
        $region49: #{tpu_custom_call.1} parent=39 // pred_check
          %p659 = pneg %p161
        $region50: #{tpu_custom_call.1} parent=39 // pred_check_branch
          %661 = sbr.rel (%p659) target = $region52
        $region51: #{tpu_custom_call.1} parent=39 // pred_region
          %s663 = ssub.s32 32, 32
          %664 = vsyncadd %s655, %s663
          %s665 = smul.addr %s23, 2
          %s666 = smul.addr %s665, 16
          %s667 = scalar_lea.hbm %s5, %s666
          %s669 = sshll.u32 %s658, 4
          %s670 = int_to_ptr.vmem [resolvable:$true] %s669
          %672 = dma.vmem_to_hbm [thread:$0]  %s670, 32, %s667, %s655
        $region52: #{tpu_custom_call.1} parent=39 // pred_fallthru
          _
      $region40: #{tpu_custom_call.1} parent=5 // pred_fallthru
        _
      %p673 = scmp.le.s32.totalorder 2, %s14
      // Predicated region
      $region53: #{tpu_custom_call.1} parent=5 // pred_check
        %p674 = pneg %p673
      $region54: #{tpu_custom_call.1} parent=5 // pred_check_branch
        %676 = sbr.rel (%p674) target = $region56
      $region55: #{tpu_custom_call.1} parent=5 // pred_region
        %s677 = ssub.s32 %s14, 2
        // Predicated region
        $region57: #{tpu_custom_call.1} parent=55 // pred_check
          %p678 = pneg %p167
        $region58: #{tpu_custom_call.1} parent=55 // pred_check_branch
          %680 = sbr.rel (%p678) target = $region60
        $region59: #{tpu_custom_call.1} parent=55 // pred_region
          %s681 = sand.u32 %s152, 1
          %s682 = scalar_lea.sflag [#allocation4], %s681
          %s683 = sand.u32 %s152, 1
          %s684 = smul.addr %s683, 2
          %s685 = scalar_lea.vmem [#allocation3], %s684
          %686 = dma.done %s682, 32
        $region60: #{tpu_custom_call.1} parent=55 // pred_fallthru
          _
      $region56: #{tpu_custom_call.1} parent=5 // pred_fallthru
        _
    $region6: #{tpu_custom_call.1} parent=1 // loop_footer
      %s18 = sadd.s32 1, %s14
    $region7: #{tpu_custom_call.1} parent=1 // loop_footer_branch
      %13 = sbr.rel target = $region3
    $region8: #{tpu_custom_call.1} parent=1 // loop_exit
      _
    %687 = vsyncpa [#allocation4], 1
    %s688 = scalar_lea.sflag [#allocation4], 1
    %689 = vsyncpa %s688, 1

</llo_original>
